<compile_context>
chip_gen: v6e
topology: v6e:2x2x1
jax: 0.10.0
libtpu: 0.0.40
codegen_flags: <defaults>
</compile_context>

<pallas_src>
import functools

import jax
import jax.numpy as jnp
from jax.experimental import pallas as pl
from jax.experimental.pallas import tpu as pltpu


def rnn_kernel(x_ref, wih_ref, whh_ref, b_ref, wfc_ref, bfc_ref, out_ref, *,
               seq_len, batch, max_full_unroll=16, partial_unroll=8):
    T, B = seq_len, batch
    Hp = whh_ref.shape[-1]

    # ---- Hoisted input projection (off the serial chain) ----------------------------
    # One (T*B, Ep) x (Ep, Hp) matmul for ALL timesteps; bias broadcast folded in once.
    # Inputs may be bf16 (v6e/v7x MXU fast path); accumulation is always f32.
    pre = (
        jnp.dot(x_ref[...], wih_ref[...], preferred_element_type=jnp.float32)
        + b_ref[...]
    )  # (T*B, Hp) f32, kept as a traced value (no VMEM scratch round-trip)

    # ---- Recurrence ------------------------------------------------------------------
    whh = whh_ref[...]          # recurrent weights loaded once, reused every step
    mxu_dtype = whh.dtype       # bf16 or f32 for MXU inputs

    def step(pre_t, h):
        # h carry / accumulation / tanh stay f32; only the MXU inputs may be bf16.
        y = jnp.dot(h.astype(mxu_dtype), whh, preferred_element_type=jnp.float32)
        return jnp.tanh(pre_t + y)

    h = jnp.zeros((B, Hp), jnp.float32)
    if T <= max_full_unroll:
        # Small T: fully unrolled, static slices of the traced pre-activation.
        for t in range(T):
            h = step(pre[t * B:(t + 1) * B, :], h)
    else:
        # Long T: partial unroll keeps LLO scheduling visibility without exploding
        # code size / vreg live ranges.
        pre3 = pre.reshape(T, B, Hp)
        h = jax.lax.fori_loop(
            0, T, lambda t, hh: step(pre3[t], hh), h, unroll=partial_unroll)

    # ---- fc on the last timestep's hidden state ---------------------------------------
    # O is padded to 128 in the wrapper -> one unmasked lane-dense (B, 128) store.
    out_ref[...] = (
        jnp.dot(h, wfc_ref[...], preferred_element_type=jnp.float32) + bfc_ref[...]
    ).astype(out_ref.dtype)


def _round_up(x, m):
    return ((x + m - 1) // m) * m


def _pad_to(x, shape):
    return jnp.pad(x, [(0, s - d) for d, s in zip(x.shape, shape)])


def rnn_forward_pallas(emb_tbd, w_ih, w_hh, b_rnn, w_fc, b_fc, *, use_bf16_mxu=False):
    """emb_tbd: (T, B, E) float32 embeddings (time-major). Returns (B, O) float32."""
    T, B, E = emb_tbd.shape
    H = w_ih.shape[1]
    O = w_fc.shape[1]

    # Hardware-tile padding:
    #   batch  -> multiple of 8 (sublanes)         [zero-padding to 128 MXU rows would
    #                                               only add dead tanh work at toy batch]
    #   emb    -> multiple of 128 (lane-dense contraction for X @ W_ih)
    #   hidden -> multiple of 128 (lanes)
    #   output -> multiple of 128 (unmasked lane-dense final store)
    Bp = _round_up(B, 8)
    Ep = _round_up(E, 128)
    Hp = _round_up(H, 128)
    Op = _round_up(O, 128)

    mxu_dtype = jnp.bfloat16 if use_bf16_mxu else jnp.float32

    # Zero padding keeps the math exact: padded hidden lanes stay tanh(0)=0 and never
    # contaminate real lanes; padded batch rows / output lanes are sliced off.
    emb_p = _pad_to(emb_tbd, (T, Bp, Ep)).reshape(T * Bp, Ep).astype(mxu_dtype)
    w_ih_p = _pad_to(w_ih, (Ep, Hp)).astype(mxu_dtype)
    w_hh_p = _pad_to(w_hh, (Hp, Hp)).astype(mxu_dtype)
    b_p = _pad_to(b_rnn, (1, Hp)).astype(jnp.float32)     # added after f32 accumulation
    w_fc_p = _pad_to(w_fc, (Hp, Op)).astype(jnp.float32)  # final fc stays f32
    b_fc_p = _pad_to(b_fc, (1, Op)).astype(jnp.float32)

    kernel = functools.partial(rnn_kernel, seq_len=T, batch=Bp)

    out_p = pl.pallas_call(
        kernel,
        out_shape=jax.ShapeDtypeStruct((Bp, Op), jnp.float32),
        # No grid: single invocation, every operand placed in VMEM exactly once
        # (no double-buffered weight/input copies as with a 1-iteration pipelined grid).
        in_specs=[pl.BlockSpec(memory_space=pltpu.MemorySpace.VMEM) for _ in range(6)],
        out_specs=pl.BlockSpec(memory_space=pltpu.MemorySpace.VMEM),
        compiler_params=pltpu.CompilerParams(
            vmem_limit_bytes=32 * 1024 * 1024,  # explicit; safe on v5e/v6e/v7x
        ),
    )(emb_p, w_ih_p, w_hh_p, b_p, w_fc_p, b_fc_p)

    return out_p[:B, :O]


def make_params(key, vocab_size, emb_size, hidden_size, output_size, padding_idx=0):
    k_emb, k_ih, k_hh, k_bih, k_bhh, k_fc, k_bfc = jax.random.split(key, 7)
    # Embedding table (padding row zeroed, like padding_idx in nn.Embedding)
    emb_table = jax.random.normal(k_emb, (vocab_size, emb_size), jnp.float32)
    emb_table = emb_table.at[padding_idx].set(0.0)
    # RNN weights, PyTorch-style uniform(-1/sqrt(H), 1/sqrt(H)); stored transposed
    bound = 1.0 / jnp.sqrt(hidden_size)
    w_ih = jax.random.uniform(k_ih, (emb_size, hidden_size), jnp.float32, -bound, bound)
    w_hh = jax.random.uniform(k_hh, (hidden_size, hidden_size), jnp.float32, -bound, bound)
    b_ih = jax.random.uniform(k_bih, (1, hidden_size), jnp.float32, -bound, bound)
    b_hh = jax.random.uniform(k_bhh, (1, hidden_size), jnp.float32, -bound, bound)
    # FC layer
    fbound = 1.0 / jnp.sqrt(hidden_size)
    w_fc = jax.random.uniform(k_fc, (hidden_size, output_size), jnp.float32, -fbound, fbound)
    b_fc = jax.random.uniform(k_bfc, (1, output_size), jnp.float32, -fbound, fbound)
    return emb_table, w_ih, w_hh, b_ih + b_hh, w_fc, b_fc


def rnn_ref(x_ids, emb_table, w_ih, w_hh, b_rnn, w_fc, b_fc):
    """Pure-JAX f32 reference matching the PyTorch forward."""
    emb = emb_table[x_ids]                       # (B, T, E)
    B, T, E = emb.shape
    h = jnp.zeros((B, w_ih.shape[1]), jnp.float32)
    for t in range(T):
        h = jnp.tanh(emb[:, t, :] @ w_ih + h @ w_hh + b_rnn)
    return h @ w_fc + b_fc                       # fc(out[:, -1, :])


if __name__ == "__main__":
    # Small, forward-consistent shapes
    batch, seq = 2, 8
    vocab_size, emb_size, hidden_size, output_size = 100, 32, 32, 1

    key = jax.random.PRNGKey(0)
    k_x, k_p = jax.random.split(key)
    # Token ids (B, T); id 0 acts as padding (its embedding row is zero)
    x_ids = jax.random.randint(k_x, (batch, seq), 0, vocab_size, dtype=jnp.int32)

    emb_table, w_ih, w_hh, b_rnn, w_fc, b_fc = make_params(
        k_p, vocab_size, emb_size, hidden_size, output_size
    )

    # Glue (embedding gather + transpose to time-major) kept in XLA for now.
    emb = emb_table[x_ids]                   # (B, T, E)
    emb_tbd = jnp.transpose(emb, (1, 0, 2))  # (T, B, E)

    ref = rnn_ref(x_ids, emb_table, w_ih, w_hh, b_rnn, w_fc, b_fc)

    # f32 MXU path: bit-for-bit semantics of the module, tight tolerance.
    out_f32 = rnn_forward_pallas(emb_tbd, w_ih, w_hh, b_rnn, w_fc, b_fc,
                                 use_bf16_mxu=False)
    out_f32 = jax.block_until_ready(out_f32)
    assert out_f32.shape == (batch, output_size)
    assert jnp.allclose(out_f32, ref, atol=1e-4, rtol=1e-4), (out_f32, ref)

    # bf16-MXU-input path (v6e/v7x fast path; f32 accumulation / carry), looser tolerance.
    out_bf16 = rnn_forward_pallas(emb_tbd, w_ih, w_hh, b_rnn, w_fc, b_fc,
                                  use_bf16_mxu=True)
    out_bf16 = jax.block_until_ready(out_bf16)
    assert out_bf16.shape == (batch, output_size)
    assert jnp.allclose(out_bf16, ref, atol=5e-2, rtol=5e-2), (out_bf16, ref)

    print("KERNEL_OK")
</pallas_src>

<mosaic_0001>
module attributes {stable_mosaic.version = 11 : i64} {
  func.func @rnn_kernel(%arg0: memref<64x128xf32, #tpu.memory_space<vmem>>, %arg1: memref<128x128xf32, #tpu.memory_space<vmem>>, %arg2: memref<128x128xf32, #tpu.memory_space<vmem>>, %arg3: memref<1x128xf32, #tpu.memory_space<vmem>>, %arg4: memref<128x128xf32, #tpu.memory_space<vmem>>, %arg5: memref<1x128xf32, #tpu.memory_space<vmem>>, %arg6: memref<8x128xf32, #tpu.memory_space<vmem>>) attributes {dimension_semantics = [], scalar_prefetch = 0 : i64, scratch_operands = 0 : i64, tpu.core_type = #tpu.core_type<tc>} {
    %c0 = arith.constant 0 : index
    %c0_0 = arith.constant 0 : index
    %0 = vector.load %arg0[%c0, %c0_0] : memref<64x128xf32, #tpu.memory_space<vmem>>, vector<64x128xf32>
    %c0_1 = arith.constant 0 : index
    %c0_2 = arith.constant 0 : index
    %1 = vector.load %arg1[%c0_1, %c0_2] : memref<128x128xf32, #tpu.memory_space<vmem>>, vector<128x128xf32>
    %cst = arith.constant dense<0.000000e+00> : vector<64x128xf32>
    %2 = tpu.matmul %0, %1, %cst {dimension_numbers = #tpu.dot_dimension_numbers<[1], [0], [0], [1], [0, 0, 1, 1], [], []>} : vector<64x128xf32>, vector<128x128xf32>, vector<64x128xf32> -> vector<64x128xf32>
    %c0_3 = arith.constant 0 : index
    %c0_4 = arith.constant 0 : index
    %3 = vector.load %arg3[%c0_3, %c0_4] : memref<1x128xf32, #tpu.memory_space<vmem>>, vector<1x128xf32>
    %4 = vector.broadcast %3 : vector<1x128xf32> to vector<64x128xf32>
    %5 = arith.addf %2, %4 : vector<64x128xf32>
    %c0_5 = arith.constant 0 : index
    %c0_6 = arith.constant 0 : index
    %6 = vector.load %arg2[%c0_5, %c0_6] : memref<128x128xf32, #tpu.memory_space<vmem>>, vector<128x128xf32>
    %cst_7 = arith.constant 0.000000e+00 : f32
    %7 = vector.broadcast %cst_7 : f32 to vector<8x128xf32>
    %8 = vector.extract_strided_slice %5 {offsets = [0, 0], sizes = [8, 128], strides = [1, 1]} : vector<64x128xf32> to vector<8x128xf32>
    %cst_8 = arith.constant dense<0.000000e+00> : vector<8x128xf32>
    %9 = tpu.matmul %7, %6, %cst_8 {dimension_numbers = #tpu.dot_dimension_numbers<[1], [0], [0], [1], [0, 0, 1, 1], [], []>} : vector<8x128xf32>, vector<128x128xf32>, vector<8x128xf32> -> vector<8x128xf32>
    %10 = arith.addf %8, %9 : vector<8x128xf32>
    %11 = math.tanh %10 : vector<8x128xf32>
    %12 = vector.extract_strided_slice %5 {offsets = [8, 0], sizes = [8, 128], strides = [1, 1]} : vector<64x128xf32> to vector<8x128xf32>
    %cst_9 = arith.constant dense<0.000000e+00> : vector<8x128xf32>
    %13 = tpu.matmul %11, %6, %cst_9 {dimension_numbers = #tpu.dot_dimension_numbers<[1], [0], [0], [1], [0, 0, 1, 1], [], []>} : vector<8x128xf32>, vector<128x128xf32>, vector<8x128xf32> -> vector<8x128xf32>
    %14 = arith.addf %12, %13 : vector<8x128xf32>
    %15 = math.tanh %14 : vector<8x128xf32>
    %16 = vector.extract_strided_slice %5 {offsets = [16, 0], sizes = [8, 128], strides = [1, 1]} : vector<64x128xf32> to vector<8x128xf32>
    %cst_10 = arith.constant dense<0.000000e+00> : vector<8x128xf32>
    %17 = tpu.matmul %15, %6, %cst_10 {dimension_numbers = #tpu.dot_dimension_numbers<[1], [0], [0], [1], [0, 0, 1, 1], [], []>} : vector<8x128xf32>, vector<128x128xf32>, vector<8x128xf32> -> vector<8x128xf32>
    %18 = arith.addf %16, %17 : vector<8x128xf32>
    %19 = math.tanh %18 : vector<8x128xf32>
    %20 = vector.extract_strided_slice %5 {offsets = [24, 0], sizes = [8, 128], strides = [1, 1]} : vector<64x128xf32> to vector<8x128xf32>
    %cst_11 = arith.constant dense<0.000000e+00> : vector<8x128xf32>
    %21 = tpu.matmul %19, %6, %cst_11 {dimension_numbers = #tpu.dot_dimension_numbers<[1], [0], [0], [1], [0, 0, 1, 1], [], []>} : vector<8x128xf32>, vector<128x128xf32>, vector<8x128xf32> -> vector<8x128xf32>
    %22 = arith.addf %20, %21 : vector<8x128xf32>
    %23 = math.tanh %22 : vector<8x128xf32>
    %24 = vector.extract_strided_slice %5 {offsets = [32, 0], sizes = [8, 128], strides = [1, 1]} : vector<64x128xf32> to vector<8x128xf32>
    %cst_12 = arith.constant dense<0.000000e+00> : vector<8x128xf32>
    %25 = tpu.matmul %23, %6, %cst_12 {dimension_numbers = #tpu.dot_dimension_numbers<[1], [0], [0], [1], [0, 0, 1, 1], [], []>} : vector<8x128xf32>, vector<128x128xf32>, vector<8x128xf32> -> vector<8x128xf32>
    %26 = arith.addf %24, %25 : vector<8x128xf32>
    %27 = math.tanh %26 : vector<8x128xf32>
    %28 = vector.extract_strided_slice %5 {offsets = [40, 0], sizes = [8, 128], strides = [1, 1]} : vector<64x128xf32> to vector<8x128xf32>
    %cst_13 = arith.constant dense<0.000000e+00> : vector<8x128xf32>
    %29 = tpu.matmul %27, %6, %cst_13 {dimension_numbers = #tpu.dot_dimension_numbers<[1], [0], [0], [1], [0, 0, 1, 1], [], []>} : vector<8x128xf32>, vector<128x128xf32>, vector<8x128xf32> -> vector<8x128xf32>
    %30 = arith.addf %28, %29 : vector<8x128xf32>
    %31 = math.tanh %30 : vector<8x128xf32>
    %32 = vector.extract_strided_slice %5 {offsets = [48, 0], sizes = [8, 128], strides = [1, 1]} : vector<64x128xf32> to vector<8x128xf32>
    %cst_14 = arith.constant dense<0.000000e+00> : vector<8x128xf32>
    %33 = tpu.matmul %31, %6, %cst_14 {dimension_numbers = #tpu.dot_dimension_numbers<[1], [0], [0], [1], [0, 0, 1, 1], [], []>} : vector<8x128xf32>, vector<128x128xf32>, vector<8x128xf32> -> vector<8x128xf32>
    %34 = arith.addf %32, %33 : vector<8x128xf32>
    %35 = math.tanh %34 : vector<8x128xf32>
    %36 = vector.extract_strided_slice %5 {offsets = [56, 0], sizes = [8, 128], strides = [1, 1]} : vector<64x128xf32> to vector<8x128xf32>
    %cst_15 = arith.constant dense<0.000000e+00> : vector<8x128xf32>
    %37 = tpu.matmul %35, %6, %cst_15 {dimension_numbers = #tpu.dot_dimension_numbers<[1], [0], [0], [1], [0, 0, 1, 1], [], []>} : vector<8x128xf32>, vector<128x128xf32>, vector<8x128xf32> -> vector<8x128xf32>
    %38 = arith.addf %36, %37 : vector<8x128xf32>
    %39 = math.tanh %38 : vector<8x128xf32>
    %c0_16 = arith.constant 0 : index
    %c0_17 = arith.constant 0 : index
    %40 = vector.load %arg4[%c0_16, %c0_17] : memref<128x128xf32, #tpu.memory_space<vmem>>, vector<128x128xf32>
    %cst_18 = arith.constant dense<0.000000e+00> : vector<8x128xf32>
    %41 = tpu.matmul %39, %40, %cst_18 {dimension_numbers = #tpu.dot_dimension_numbers<[1], [0], [0], [1], [0, 0, 1, 1], [], []>} : vector<8x128xf32>, vector<128x128xf32>, vector<8x128xf32> -> vector<8x128xf32>
    %c0_19 = arith.constant 0 : index
    %c0_20 = arith.constant 0 : index
    %42 = vector.load %arg5[%c0_19, %c0_20] : memref<1x128xf32, #tpu.memory_space<vmem>>, vector<1x128xf32>
    %43 = vector.broadcast %42 : vector<1x128xf32> to vector<8x128xf32>
    %44 = arith.addf %41, %43 : vector<8x128xf32>
    %c0_21 = arith.constant 0 : index
    %c0_22 = arith.constant 0 : index
    %45 = vector.load %arg6[%c0_21, %c0_22] : memref<8x128xf32, #tpu.memory_space<vmem>>, vector<8x128xf32>
    tpu.vector_store %arg6[%c0_21, %c0_22], %44 {strides = array<i32>} : memref<8x128xf32, #tpu.memory_space<vmem>>, vector<8x128xf32>,
    return
  }
}

</mosaic_0001>

<llo_original>
// kernel: tpu_custom_call.1
$region0: #{tpu_custom_call.1}
  #allocation0 [shape = 'u32[]', space=smem, size = 0x4, offset = 0x4, fixed_abs, tag = 'smem constant byte address 0x4 - core index']
  #allocation1 [shape = 'u32[144,128]{1,0:T(1,128)}', space=vmem, size = 0x12000, scoped, tag = 'internal scratch']
  %s0 = inlined_call_operand.hbm [shape: f32[64,128], index: 0, kind: input, shape index: {}]
  %s1 = inlined_call_operand.hbm [shape: f32[128,128], index: 1, kind: input, shape index: {}]
  %s2 = inlined_call_operand.hbm [shape: f32[128,128], index: 2, kind: input, shape index: {}]
  %s3 = inlined_call_operand.vmem [shape: f32[1,128], index: 3, kind: input, shape index: {}]
  %s4 = inlined_call_operand.hbm [shape: f32[128,128], index: 4, kind: input, shape index: {}]
  %s5 = inlined_call_operand.vmem [shape: f32[1,128], index: 5, kind: input, shape index: {}]
  %s6 = inlined_call_operand.hbm [shape: f32[8,128], index: 6, kind: output, shape index: {}]
  %s7 = sld [smem:[#allocation0]]
  $region50: #{tpu_custom_call.1} parent=0
    _
  %s9 = ssub.s32 1, %s7
  %s10 = scalar_select 0, %s9, %s7
  $region1: #{tpu_custom_call.1} parent=0
    #allocation2 [shape = 'u8[32768]{0}', space=vmem, size = 0x8000, scoped, tag = 'input window, operand 0, single buffered']
    #allocation3 [shape = 's32[1]{0}', space=sflag, size = 0x4, scoped, tag = 'scoped memory for tpu_custom_call.1']
    #allocation4 [shape = 's32[1]{0}', space=sflag, size = 0x4, scoped, tag = 'scoped memory for tpu_custom_call.1']
    #allocation5 [shape = 'u8[65536]{0}', space=vmem, size = 0x10000, scoped, tag = 'input window, operand 1, single buffered']
    #allocation6 [shape = 's32[1]{0}', space=sflag, size = 0x4, scoped, tag = 'scoped memory for tpu_custom_call.1']
    #allocation7 [shape = 'u8[65536]{0}', space=vmem, size = 0x10000, scoped, tag = 'input window, operand 2, single buffered']
    #allocation8 [shape = 'u8[65536]{0}', space=vmem, size = 0x10000, scoped, tag = 'input window, operand 4, single buffered']
    #allocation9 [shape = 's32[1]{0}', space=sflag, size = 0x4, scoped, tag = 'scoped memory for tpu_custom_call.1']
    #allocation10 [shape = 'u8[4096]{0}', space=vmem, size = 0x1000, scoped, tag = 'output window, operand 0, single buffered']
    %11 = vsyncpa [#allocation3], 0
    %12 = vsyncpa [#allocation6], 0
    %13 = vsyncpa [#allocation9], 0
    %14 = vsyncpa [#allocation4], 0
    // Predicated region
    $region2: #{tpu_custom_call.1} parent=1 // pred_check
      _
    $region3: #{tpu_custom_call.1} parent=1 // pred_check_branch
      %16 = sbr.rel (0) target = $region5
    $region4: #{tpu_custom_call.1} parent=1 // pred_region
      %s18 = ssub.s32 1024, 1024
      %19 = vsyncadd [#allocation3], %s18
      %s20 = sshll.u32 [#allocation2], 4
      %s21 = int_to_ptr.vmem [resolvable:$true] %s20
      %26 = dma.hbm_to_vmem [thread:$0]  %s0, 1024, %s21, [#allocation3], 128, 128, 8
    $region5: #{tpu_custom_call.1} parent=1 // pred_fallthru
      _
    // Predicated region
    $region6: #{tpu_custom_call.1} parent=1 // pred_check
      _
    $region7: #{tpu_custom_call.1} parent=1 // pred_check_branch
      %28 = sbr.rel (0) target = $region9
    $region8: #{tpu_custom_call.1} parent=1 // pred_region
      %s30 = ssub.s32 2048, 2048
      %31 = vsyncadd [#allocation6], %s30
      %s32 = sshll.u32 [#allocation5], 4
      %s33 = int_to_ptr.vmem [resolvable:$true] %s32
      %38 = dma.hbm_to_vmem [thread:$0]  %s1, 2048, %s33, [#allocation6], 128, 128, 8
    $region9: #{tpu_custom_call.1} parent=1 // pred_fallthru
      _
    // Predicated region
    $region10: #{tpu_custom_call.1} parent=1 // pred_check
      _
    $region11: #{tpu_custom_call.1} parent=1 // pred_check_branch
      %40 = sbr.rel (0) target = $region13
    $region12: #{tpu_custom_call.1} parent=1 // pred_region
      %s42 = ssub.s32 2048, 2048
      %43 = vsyncadd [#allocation6], %s42
      %s44 = sshll.u32 [#allocation7], 4
      %s45 = int_to_ptr.vmem [resolvable:$true] %s44
      %50 = dma.hbm_to_vmem [thread:$0]  %s2, 2048, %s45, [#allocation6], 128, 128, 8
    $region13: #{tpu_custom_call.1} parent=1 // pred_fallthru
      _
    // Predicated region
    $region14: #{tpu_custom_call.1} parent=1 // pred_check
      _
    $region15: #{tpu_custom_call.1} parent=1 // pred_check_branch
      %52 = sbr.rel (0) target = $region17
    $region16: #{tpu_custom_call.1} parent=1 // pred_region
      _
    $region17: #{tpu_custom_call.1} parent=1 // pred_fallthru
      _
    // Predicated region
    $region18: #{tpu_custom_call.1} parent=1 // pred_check
      _
    $region19: #{tpu_custom_call.1} parent=1 // pred_check_branch
      %54 = sbr.rel (0) target = $region21
    $region20: #{tpu_custom_call.1} parent=1 // pred_region
      %s56 = ssub.s32 2048, 2048
      %57 = vsyncadd [#allocation9], %s56
      %s58 = sshll.u32 [#allocation8], 4
      %s59 = int_to_ptr.vmem [resolvable:$true] %s58
      %64 = dma.hbm_to_vmem [thread:$0]  %s4, 2048, %s59, [#allocation9], 128, 128, 8
    $region21: #{tpu_custom_call.1} parent=1 // pred_fallthru
      _
    // Predicated region
    $region22: #{tpu_custom_call.1} parent=1 // pred_check
      _
    $region23: #{tpu_custom_call.1} parent=1 // pred_check_branch
      %66 = sbr.rel (0) target = $region25
    $region24: #{tpu_custom_call.1} parent=1 // pred_region
      _
    $region25: #{tpu_custom_call.1} parent=1 // pred_fallthru
      _
    // Predicated region
    $region26: #{tpu_custom_call.1} parent=1 // pred_check
      _
    $region27: #{tpu_custom_call.1} parent=1 // pred_check_branch
      %68 = sbr.rel (0) target = $region29
    $region28: #{tpu_custom_call.1} parent=1 // pred_region
      %69 = dma.done [#allocation3], 1024
    $region29: #{tpu_custom_call.1} parent=1 // pred_fallthru
      _
    // Predicated region
    $region30: #{tpu_custom_call.1} parent=1 // pred_check
      _
    $region31: #{tpu_custom_call.1} parent=1 // pred_check_branch
      %71 = sbr.rel (0) target = $region33
    $region32: #{tpu_custom_call.1} parent=1 // pred_region
      %72 = dma.done [#allocation6], 2048
    $region33: #{tpu_custom_call.1} parent=1 // pred_fallthru
      _
    // Predicated region
    $region34: #{tpu_custom_call.1} parent=1 // pred_check
      _
    $region35: #{tpu_custom_call.1} parent=1 // pred_check_branch
      %74 = sbr.rel (0) target = $region37
    $region36: #{tpu_custom_call.1} parent=1 // pred_region
      %75 = dma.done [#allocation6], 2048
    $region37: #{tpu_custom_call.1} parent=1 // pred_fallthru
      _
    // Predicated region
    $region38: #{tpu_custom_call.1} parent=1 // pred_check
      _
    $region39: #{tpu_custom_call.1} parent=1 // pred_check_branch
      %77 = sbr.rel (0) target = $region41
    $region40: #{tpu_custom_call.1} parent=1 // pred_region
      %78 = dma.done [#allocation9], 2048
    $region41: #{tpu_custom_call.1} parent=1 // pred_fallthru
      _
    %v79 = vld [vmem:[#allocation2] sm:$0xff]
    %v80 = vld [vmem:[#allocation2 + $0x8] sm:$0xff]
    %v81 = vld [vmem:[#allocation2 + $0x10] sm:$0xff]
    %v82 = vld [vmem:[#allocation2 + $0x18] sm:$0xff]
    %v83 = vld [vmem:[#allocation2 + $0x20] sm:$0xff]
    %v84 = vld [vmem:[#allocation2 + $0x28] sm:$0xff]
    %v85 = vld [vmem:[#allocation2 + $0x30] sm:$0xff]
    %v86 = vld [vmem:[#allocation2 + $0x38] sm:$0xff]
    %v87 = vld [vmem:[#allocation5] sm:$0xff]
    %v88 = vld [vmem:[#allocation5 + $0x8] sm:$0xff]
    %v89 = vld [vmem:[#allocation5 + $0x10] sm:$0xff]
    %v90 = vld [vmem:[#allocation5 + $0x18] sm:$0xff]
    %v91 = vld [vmem:[#allocation5 + $0x20] sm:$0xff]
    %v92 = vld [vmem:[#allocation5 + $0x28] sm:$0xff]
    %v93 = vld [vmem:[#allocation5 + $0x30] sm:$0xff]
    %v94 = vld [vmem:[#allocation5 + $0x38] sm:$0xff]
    %v95 = vld [vmem:[#allocation5 + $0x40] sm:$0xff]
    %v96 = vld [vmem:[#allocation5 + $0x48] sm:$0xff]
    %v97 = vld [vmem:[#allocation5 + $0x50] sm:$0xff]
    %v98 = vld [vmem:[#allocation5 + $0x58] sm:$0xff]
    %v99 = vld [vmem:[#allocation5 + $0x60] sm:$0xff]
    %v100 = vld [vmem:[#allocation5 + $0x68] sm:$0xff]
    %v101 = vld [vmem:[#allocation5 + $0x70] sm:$0xff]
    %v102 = vld [vmem:[#allocation5 + $0x78] sm:$0xff]
    %v103 = vld [vmem:[%s3] sm:$0x1]
    %v105 = vlaneseq
    %v106 = vshrl.u32 %v105, 7
    %v107 = vsub.s32 0, %v106
    %v108 = vrot.slane %v103, %v107
    %110 = vmatprep.subr.mxu0 0.0
    %111 = vmatpush1.msra.mxu0 %v102
    %112 = vmatprep.subr.mxu0 0.0
    %113 = vmatpush1.msra.mxu0 %v101
    %114 = vmatprep.subr.mxu0 0.0
    %115 = vmatpush1.msra.mxu0 %v100
    %116 = vmatprep.subr.mxu0 0.0
    %117 = vmatpush1.msra.mxu0 %v99
    %118 = vmatprep.subr.mxu0 0.0
    %119 = vmatpush1.msra.mxu0 %v98
    %120 = vmatprep.subr.mxu0 0.0
    %121 = vmatpush1.msra.mxu0 %v97
    %122 = vmatprep.subr.mxu0 0.0
    %123 = vmatpush1.msra.mxu0 %v96
    %124 = vmatprep.subr.mxu0 0.0
    %125 = vmatpush1.msra.mxu0 %v95
    %126 = vmatprep.subr.mxu0 0.0
    %127 = vmatpush1.msra.mxu0 %v94
    %128 = vmatprep.subr.mxu0 0.0
    %129 = vmatpush1.msra.mxu0 %v93
    %130 = vmatprep.subr.mxu0 0.0
    %131 = vmatpush1.msra.mxu0 %v92
    %132 = vmatprep.subr.mxu0 0.0
    %133 = vmatpush1.msra.mxu0 %v91
    %134 = vmatprep.subr.mxu0 0.0
    %135 = vmatpush1.msra.mxu0 %v90
    %136 = vmatprep.subr.mxu0 0.0
    %137 = vmatpush1.msra.mxu0 %v89
    %138 = vmatprep.subr.mxu0 0.0
    %139 = vmatpush1.msra.mxu0 %v88
    %140 = vmatprep.subr.mxu0 0.0
    %141 = vmatpush1.msra.mxu0 %v87
    %142 = vmatprep.subr.mxu0 0.0
    %143 = vmatpush2.msra.mxu0 0.0
    %144 = vmatprep.subr.mxu0 0.0
    %145 = vmatpush2.msra.mxu0 0.0
    %146 = vmatprep.subr.mxu0 0.0
    %147 = vmatpush2.msra.mxu0 0.0
    %148 = vmatprep.subr.mxu0 0.0
    %149 = vmatpush2.msra.mxu0 0.0
    %150 = vmatprep.subr.mxu0 0.0
    %151 = vmatpush2.msra.mxu0 0.0
    %152 = vmatprep.subr.mxu0 0.0
    %153 = vmatpush2.msra.mxu0 0.0
    %154 = vmatprep.subr.mxu0 0.0
    %155 = vmatpush2.msra.mxu0 0.0
    %156 = vmatprep.subr.mxu0 0.0
    %157 = vmatpush2.msra.mxu0 0.0
    %158 = vmatprep.subr.mxu0 0.0
    %159 = vmatpush2.msra.mxu0 0.0
    %160 = vmatprep.subr.mxu0 0.0
    %161 = vmatpush2.msra.mxu0 0.0
    %162 = vmatprep.subr.mxu0 0.0
    %163 = vmatpush2.msra.mxu0 0.0
    %164 = vmatprep.subr.mxu0 0.0
    %165 = vmatpush2.msra.mxu0 0.0
    %166 = vmatprep.subr.mxu0 0.0
    %167 = vmatpush2.msra.mxu0 0.0
    %168 = vmatprep.subr.mxu0 0.0
    %169 = vmatpush2.msra.mxu0 0.0
    %170 = vmatprep.subr.mxu0 0.0
    %171 = vmatpush2.msra.mxu0 0.0
    %172 = vmatprep.subr.mxu0 0.0
    %173 = vmatpush2.msra.mxu0 0.0
    %174 = vmatprep.mubr.f32.mxu0 0.0
    %175 = vmatmul.mubr.f32.gmra.mxu0 %v79
    %v176 = vpop.f32.mrf.mxu0
    %v177 = vadd.f32 %v108, %v176
    %v178 = vpop.f32.mrf.mxu0
    %179 = vmatprep.mubr.f32.mxu0 0.0
    %180 = vmatmul.mubr.f32.gmra.mxu0 %v80
    %v181 = vpop.f32.mrf.mxu0
    %v182 = vadd.f32 %v108, %v181
    %v183 = vpop.f32.mrf.mxu0
    %184 = vmatprep.mubr.f32.mxu0 0.0
    %185 = vmatmul.mubr.f32.gmra.mxu0 %v81
    %v186 = vpop.f32.mrf.mxu0
    %v187 = vadd.f32 %v108, %v186
    %v188 = vpop.f32.mrf.mxu0
    %189 = vmatprep.mubr.f32.mxu0 0.0
    %190 = vmatmul.mubr.f32.gmra.mxu0 %v82
    %v191 = vpop.f32.mrf.mxu0
    %v192 = vadd.f32 %v108, %v191
    %v193 = vpop.f32.mrf.mxu0
    %194 = vmatprep.mubr.f32.mxu0 0.0
    %195 = vmatmul.mubr.f32.gmra.mxu0 %v83
    %v196 = vpop.f32.mrf.mxu0
    %v197 = vadd.f32 %v108, %v196
    %v198 = vpop.f32.mrf.mxu0
    %199 = vmatprep.mubr.f32.mxu0 0.0
    %200 = vmatmul.mubr.f32.gmra.mxu0 %v84
    %v201 = vpop.f32.mrf.mxu0
    %v202 = vadd.f32 %v108, %v201
    %v203 = vpop.f32.mrf.mxu0
    %204 = vmatprep.mubr.f32.mxu0 0.0
    %205 = vmatmul.mubr.f32.gmra.mxu0 %v85
    %v206 = vpop.f32.mrf.mxu0
    %v207 = vadd.f32 %v108, %v206
    %v208 = vpop.f32.mrf.mxu0
    %209 = vmatprep.mubr.f32.mxu0 0.0
    %210 = vmatmul.mubr.f32.gmra.mxu0 %v86
    %v211 = vpop.f32.mrf.mxu0
    %v212 = vadd.f32 %v108, %v211
    %v213 = vpop.f32.mrf.mxu0
    %214 = vdwg.mxu0
    %v215 = vld [vmem:[#allocation7] sm:$0xff]
    %v216 = vld [vmem:[#allocation7 + $0x8] sm:$0xff]
    %v217 = vld [vmem:[#allocation7 + $0x10] sm:$0xff]
    %v218 = vld [vmem:[#allocation7 + $0x18] sm:$0xff]
    %v219 = vld [vmem:[#allocation7 + $0x20] sm:$0xff]
    %v220 = vld [vmem:[#allocation7 + $0x28] sm:$0xff]
    %v221 = vld [vmem:[#allocation7 + $0x30] sm:$0xff]
    %v222 = vld [vmem:[#allocation7 + $0x38] sm:$0xff]
    %v223 = vld [vmem:[#allocation7 + $0x40] sm:$0xff]
    %v224 = vld [vmem:[#allocation7 + $0x48] sm:$0xff]
    %v225 = vld [vmem:[#allocation7 + $0x50] sm:$0xff]
    %v226 = vld [vmem:[#allocation7 + $0x58] sm:$0xff]
    %v227 = vld [vmem:[#allocation7 + $0x60] sm:$0xff]
    %v228 = vld [vmem:[#allocation7 + $0x68] sm:$0xff]
    %v229 = vld [vmem:[#allocation7 + $0x70] sm:$0xff]
    %v230 = vld [vmem:[#allocation7 + $0x78] sm:$0xff]
    %231 = vmatprep.subr.mxu0 0.0
    %232 = vmatpush1.msra.mxu0 %v230
    %233 = vmatprep.subr.mxu0 0.0
    %234 = vmatpush1.msra.mxu0 %v229
    %235 = vmatprep.subr.mxu0 0.0
    %236 = vmatpush1.msra.mxu0 %v228
    %237 = vmatprep.subr.mxu0 0.0
    %238 = vmatpush1.msra.mxu0 %v227
    %239 = vmatprep.subr.mxu0 0.0
    %240 = vmatpush1.msra.mxu0 %v226
    %241 = vmatprep.subr.mxu0 0.0
    %242 = vmatpush1.msra.mxu0 %v225
    %243 = vmatprep.subr.mxu0 0.0
    %244 = vmatpush1.msra.mxu0 %v224
    %245 = vmatprep.subr.mxu0 0.0
    %246 = vmatpush1.msra.mxu0 %v223
    %247 = vmatprep.subr.mxu0 0.0
    %248 = vmatpush1.msra.mxu0 %v222
    %249 = vmatprep.subr.mxu0 0.0
    %250 = vmatpush1.msra.mxu0 %v221
    %251 = vmatprep.subr.mxu0 0.0
    %252 = vmatpush1.msra.mxu0 %v220
    %253 = vmatprep.subr.mxu0 0.0
    %254 = vmatpush1.msra.mxu0 %v219
    %255 = vmatprep.subr.mxu0 0.0
    %256 = vmatpush1.msra.mxu0 %v218
    %257 = vmatprep.subr.mxu0 0.0
    %258 = vmatpush1.msra.mxu0 %v217
    %259 = vmatprep.subr.mxu0 0.0
    %260 = vmatpush1.msra.mxu0 %v216
    %261 = vmatprep.subr.mxu0 0.0
    %262 = vmatpush1.msra.mxu0 %v215
    %263 = vmatprep.subr.mxu0 0.0
    %264 = vmatpush2.msra.mxu0 0.0
    %265 = vmatprep.subr.mxu0 0.0
    %266 = vmatpush2.msra.mxu0 0.0
    %267 = vmatprep.subr.mxu0 0.0
    %268 = vmatpush2.msra.mxu0 0.0
    %269 = vmatprep.subr.mxu0 0.0
    %270 = vmatpush2.msra.mxu0 0.0
    %271 = vmatprep.subr.mxu0 0.0
    %272 = vmatpush2.msra.mxu0 0.0
    %273 = vmatprep.subr.mxu0 0.0
    %274 = vmatpush2.msra.mxu0 0.0
    %275 = vmatprep.subr.mxu0 0.0
    %276 = vmatpush2.msra.mxu0 0.0
    %277 = vmatprep.subr.mxu0 0.0
    %278 = vmatpush2.msra.mxu0 0.0
    %279 = vmatprep.subr.mxu0 0.0
    %280 = vmatpush2.msra.mxu0 0.0
    %281 = vmatprep.subr.mxu0 0.0
    %282 = vmatpush2.msra.mxu0 0.0
    %283 = vmatprep.subr.mxu0 0.0
    %284 = vmatpush2.msra.mxu0 0.0
    %285 = vmatprep.subr.mxu0 0.0
    %286 = vmatpush2.msra.mxu0 0.0
    %287 = vmatprep.subr.mxu0 0.0
    %288 = vmatpush2.msra.mxu0 0.0
    %289 = vmatprep.subr.mxu0 0.0
    %290 = vmatpush2.msra.mxu0 0.0
    %291 = vmatprep.subr.mxu0 0.0
    %292 = vmatpush2.msra.mxu0 0.0
    %293 = vmatprep.subr.mxu0 0.0
    %294 = vmatpush2.msra.mxu0 0.0
    %295 = vmatprep.mubr.f32.mxu0 0.0
    %296 = vmatmul.mubr.f32.gmra.mxu0 0.0
    %v297 = vpop.f32.mrf.mxu0
    %v298 = vadd.f32 0.0, %v297
    %v299 = vpop.f32.mrf.mxu0
    %300 = vdwg.mxu0
    %v301 = vadd.f32 %v177, %v298
    %v302 = vtanh.pop %v301
    %303 = vmatprep.subr.mxu0 0.0
    %304 = vmatpush1.msra.mxu0 %v230
    %305 = vmatprep.subr.mxu0 0.0
    %306 = vmatpush1.msra.mxu0 %v229
    %307 = vmatprep.subr.mxu0 0.0
    %308 = vmatpush1.msra.mxu0 %v228
    %309 = vmatprep.subr.mxu0 0.0
    %310 = vmatpush1.msra.mxu0 %v227
    %311 = vmatprep.subr.mxu0 0.0
    %312 = vmatpush1.msra.mxu0 %v226
    %313 = vmatprep.subr.mxu0 0.0
    %314 = vmatpush1.msra.mxu0 %v225
    %315 = vmatprep.subr.mxu0 0.0
    %316 = vmatpush1.msra.mxu0 %v224
    %317 = vmatprep.subr.mxu0 0.0
    %318 = vmatpush1.msra.mxu0 %v223
    %319 = vmatprep.subr.mxu0 0.0
    %320 = vmatpush1.msra.mxu0 %v222
    %321 = vmatprep.subr.mxu0 0.0
    %322 = vmatpush1.msra.mxu0 %v221
    %323 = vmatprep.subr.mxu0 0.0
    %324 = vmatpush1.msra.mxu0 %v220
    %325 = vmatprep.subr.mxu0 0.0
    %326 = vmatpush1.msra.mxu0 %v219
    %327 = vmatprep.subr.mxu0 0.0
    %328 = vmatpush1.msra.mxu0 %v218
    %329 = vmatprep.subr.mxu0 0.0
    %330 = vmatpush1.msra.mxu0 %v217
    %331 = vmatprep.subr.mxu0 0.0
    %332 = vmatpush1.msra.mxu0 %v216
    %333 = vmatprep.subr.mxu0 0.0
    %334 = vmatpush1.msra.mxu0 %v215
    %335 = vmatprep.subr.mxu0 0.0
    %336 = vmatpush2.msra.mxu0 0.0
    %337 = vmatprep.subr.mxu0 0.0
    %338 = vmatpush2.msra.mxu0 0.0
    %339 = vmatprep.subr.mxu0 0.0
    %340 = vmatpush2.msra.mxu0 0.0
    %341 = vmatprep.subr.mxu0 0.0
    %342 = vmatpush2.msra.mxu0 0.0
    %343 = vmatprep.subr.mxu0 0.0
    %344 = vmatpush2.msra.mxu0 0.0
    %345 = vmatprep.subr.mxu0 0.0
    %346 = vmatpush2.msra.mxu0 0.0
    %347 = vmatprep.subr.mxu0 0.0
    %348 = vmatpush2.msra.mxu0 0.0
    %349 = vmatprep.subr.mxu0 0.0
    %350 = vmatpush2.msra.mxu0 0.0
    %351 = vmatprep.subr.mxu0 0.0
    %352 = vmatpush2.msra.mxu0 0.0
    %353 = vmatprep.subr.mxu0 0.0
    %354 = vmatpush2.msra.mxu0 0.0
    %355 = vmatprep.subr.mxu0 0.0
    %356 = vmatpush2.msra.mxu0 0.0
    %357 = vmatprep.subr.mxu0 0.0
    %358 = vmatpush2.msra.mxu0 0.0
    %359 = vmatprep.subr.mxu0 0.0
    %360 = vmatpush2.msra.mxu0 0.0
    %361 = vmatprep.subr.mxu0 0.0
    %362 = vmatpush2.msra.mxu0 0.0
    %363 = vmatprep.subr.mxu0 0.0
    %364 = vmatpush2.msra.mxu0 0.0
    %365 = vmatprep.subr.mxu0 0.0
    %366 = vmatpush2.msra.mxu0 0.0
    %367 = vmatprep.mubr.f32.mxu0 0.0
    %368 = vmatmul.mubr.f32.gmra.mxu0 %v302
    %v369 = vpop.f32.mrf.mxu0
    %v370 = vadd.f32 0.0, %v369
    %v371 = vpop.f32.mrf.mxu0
    %372 = vdwg.mxu0
    %v373 = vadd.f32 %v182, %v370
    %v374 = vtanh.pop %v373
    %375 = vmatprep.subr.mxu0 0.0
    %376 = vmatpush1.msra.mxu0 %v230
    %377 = vmatprep.subr.mxu0 0.0
    %378 = vmatpush1.msra.mxu0 %v229
    %379 = vmatprep.subr.mxu0 0.0
    %380 = vmatpush1.msra.mxu0 %v228
    %381 = vmatprep.subr.mxu0 0.0
    %382 = vmatpush1.msra.mxu0 %v227
    %383 = vmatprep.subr.mxu0 0.0
    %384 = vmatpush1.msra.mxu0 %v226
    %385 = vmatprep.subr.mxu0 0.0
    %386 = vmatpush1.msra.mxu0 %v225
    %387 = vmatprep.subr.mxu0 0.0
    %388 = vmatpush1.msra.mxu0 %v224
    %389 = vmatprep.subr.mxu0 0.0
    %390 = vmatpush1.msra.mxu0 %v223
    %391 = vmatprep.subr.mxu0 0.0
    %392 = vmatpush1.msra.mxu0 %v222
    %393 = vmatprep.subr.mxu0 0.0
    %394 = vmatpush1.msra.mxu0 %v221
    %395 = vmatprep.subr.mxu0 0.0
    %396 = vmatpush1.msra.mxu0 %v220
    %397 = vmatprep.subr.mxu0 0.0
    %398 = vmatpush1.msra.mxu0 %v219
    %399 = vmatprep.subr.mxu0 0.0
    %400 = vmatpush1.msra.mxu0 %v218
    %401 = vmatprep.subr.mxu0 0.0
    %402 = vmatpush1.msra.mxu0 %v217
    %403 = vmatprep.subr.mxu0 0.0
    %404 = vmatpush1.msra.mxu0 %v216
    %405 = vmatprep.subr.mxu0 0.0
    %406 = vmatpush1.msra.mxu0 %v215
    %407 = vmatprep.subr.mxu0 0.0
    %408 = vmatpush2.msra.mxu0 0.0
    %409 = vmatprep.subr.mxu0 0.0
    %410 = vmatpush2.msra.mxu0 0.0
    %411 = vmatprep.subr.mxu0 0.0
    %412 = vmatpush2.msra.mxu0 0.0
    %413 = vmatprep.subr.mxu0 0.0
    %414 = vmatpush2.msra.mxu0 0.0
    %415 = vmatprep.subr.mxu0 0.0
    %416 = vmatpush2.msra.mxu0 0.0
    %417 = vmatprep.subr.mxu0 0.0
    %418 = vmatpush2.msra.mxu0 0.0
    %419 = vmatprep.subr.mxu0 0.0
    %420 = vmatpush2.msra.mxu0 0.0
    %421 = vmatprep.subr.mxu0 0.0
    %422 = vmatpush2.msra.mxu0 0.0
    %423 = vmatprep.subr.mxu0 0.0
    %424 = vmatpush2.msra.mxu0 0.0
    %425 = vmatprep.subr.mxu0 0.0
    %426 = vmatpush2.msra.mxu0 0.0
    %427 = vmatprep.subr.mxu0 0.0
    %428 = vmatpush2.msra.mxu0 0.0
    %429 = vmatprep.subr.mxu0 0.0
    %430 = vmatpush2.msra.mxu0 0.0
    %431 = vmatprep.subr.mxu0 0.0
    %432 = vmatpush2.msra.mxu0 0.0
    %433 = vmatprep.subr.mxu0 0.0
    %434 = vmatpush2.msra.mxu0 0.0
    %435 = vmatprep.subr.mxu0 0.0
    %436 = vmatpush2.msra.mxu0 0.0
    %437 = vmatprep.subr.mxu0 0.0
    %438 = vmatpush2.msra.mxu0 0.0
    %439 = vmatprep.mubr.f32.mxu0 0.0
    %440 = vmatmul.mubr.f32.gmra.mxu0 %v374
    %v441 = vpop.f32.mrf.mxu0
    %v442 = vadd.f32 0.0, %v441
    %v443 = vpop.f32.mrf.mxu0
    %444 = vdwg.mxu0
    %v445 = vadd.f32 %v187, %v442
    %v446 = vtanh.pop %v445
    %447 = vmatprep.subr.mxu0 0.0
    %448 = vmatpush1.msra.mxu0 %v230
    %449 = vmatprep.subr.mxu0 0.0
    %450 = vmatpush1.msra.mxu0 %v229
    %451 = vmatprep.subr.mxu0 0.0
    %452 = vmatpush1.msra.mxu0 %v228
    %453 = vmatprep.subr.mxu0 0.0
    %454 = vmatpush1.msra.mxu0 %v227
    %455 = vmatprep.subr.mxu0 0.0
    %456 = vmatpush1.msra.mxu0 %v226
    %457 = vmatprep.subr.mxu0 0.0
    %458 = vmatpush1.msra.mxu0 %v225
    %459 = vmatprep.subr.mxu0 0.0
    %460 = vmatpush1.msra.mxu0 %v224
    %461 = vmatprep.subr.mxu0 0.0
    %462 = vmatpush1.msra.mxu0 %v223
    %463 = vmatprep.subr.mxu0 0.0
    %464 = vmatpush1.msra.mxu0 %v222
    %465 = vmatprep.subr.mxu0 0.0
    %466 = vmatpush1.msra.mxu0 %v221
    %467 = vmatprep.subr.mxu0 0.0
    %468 = vmatpush1.msra.mxu0 %v220
    %469 = vmatprep.subr.mxu0 0.0
    %470 = vmatpush1.msra.mxu0 %v219
    %471 = vmatprep.subr.mxu0 0.0
    %472 = vmatpush1.msra.mxu0 %v218
    %473 = vmatprep.subr.mxu0 0.0
    %474 = vmatpush1.msra.mxu0 %v217
    %475 = vmatprep.subr.mxu0 0.0
    %476 = vmatpush1.msra.mxu0 %v216
    %477 = vmatprep.subr.mxu0 0.0
    %478 = vmatpush1.msra.mxu0 %v215
    %479 = vmatprep.subr.mxu0 0.0
    %480 = vmatpush2.msra.mxu0 0.0
    %481 = vmatprep.subr.mxu0 0.0
    %482 = vmatpush2.msra.mxu0 0.0
    %483 = vmatprep.subr.mxu0 0.0
    %484 = vmatpush2.msra.mxu0 0.0
    %485 = vmatprep.subr.mxu0 0.0
    %486 = vmatpush2.msra.mxu0 0.0
    %487 = vmatprep.subr.mxu0 0.0
    %488 = vmatpush2.msra.mxu0 0.0
    %489 = vmatprep.subr.mxu0 0.0
    %490 = vmatpush2.msra.mxu0 0.0
    %491 = vmatprep.subr.mxu0 0.0
    %492 = vmatpush2.msra.mxu0 0.0
    %493 = vmatprep.subr.mxu0 0.0
    %494 = vmatpush2.msra.mxu0 0.0
    %495 = vmatprep.subr.mxu0 0.0
    %496 = vmatpush2.msra.mxu0 0.0
    %497 = vmatprep.subr.mxu0 0.0
    %498 = vmatpush2.msra.mxu0 0.0
    %499 = vmatprep.subr.mxu0 0.0
    %500 = vmatpush2.msra.mxu0 0.0
    %501 = vmatprep.subr.mxu0 0.0
    %502 = vmatpush2.msra.mxu0 0.0
    %503 = vmatprep.subr.mxu0 0.0
    %504 = vmatpush2.msra.mxu0 0.0
    %505 = vmatprep.subr.mxu0 0.0
    %506 = vmatpush2.msra.mxu0 0.0
    %507 = vmatprep.subr.mxu0 0.0
    %508 = vmatpush2.msra.mxu0 0.0
    %509 = vmatprep.subr.mxu0 0.0
    %510 = vmatpush2.msra.mxu0 0.0
    %511 = vmatprep.mubr.f32.mxu0 0.0
    %512 = vmatmul.mubr.f32.gmra.mxu0 %v446
    %v513 = vpop.f32.mrf.mxu0
    %v514 = vadd.f32 0.0, %v513
    %v515 = vpop.f32.mrf.mxu0
    %516 = vdwg.mxu0
    %v517 = vadd.f32 %v192, %v514
    %v518 = vtanh.pop %v517
    %519 = vmatprep.subr.mxu0 0.0
    %520 = vmatpush1.msra.mxu0 %v230
    %521 = vmatprep.subr.mxu0 0.0
    %522 = vmatpush1.msra.mxu0 %v229
    %523 = vmatprep.subr.mxu0 0.0
    %524 = vmatpush1.msra.mxu0 %v228
    %525 = vmatprep.subr.mxu0 0.0
    %526 = vmatpush1.msra.mxu0 %v227
    %527 = vmatprep.subr.mxu0 0.0
    %528 = vmatpush1.msra.mxu0 %v226
    %529 = vmatprep.subr.mxu0 0.0
    %530 = vmatpush1.msra.mxu0 %v225
    %531 = vmatprep.subr.mxu0 0.0
    %532 = vmatpush1.msra.mxu0 %v224
    %533 = vmatprep.subr.mxu0 0.0
    %534 = vmatpush1.msra.mxu0 %v223
    %535 = vmatprep.subr.mxu0 0.0
    %536 = vmatpush1.msra.mxu0 %v222
    %537 = vmatprep.subr.mxu0 0.0
    %538 = vmatpush1.msra.mxu0 %v221
    %539 = vmatprep.subr.mxu0 0.0
    %540 = vmatpush1.msra.mxu0 %v220
    %541 = vmatprep.subr.mxu0 0.0
    %542 = vmatpush1.msra.mxu0 %v219
    %543 = vmatprep.subr.mxu0 0.0
    %544 = vmatpush1.msra.mxu0 %v218
    %545 = vmatprep.subr.mxu0 0.0
    %546 = vmatpush1.msra.mxu0 %v217
    %547 = vmatprep.subr.mxu0 0.0
    %548 = vmatpush1.msra.mxu0 %v216
    %549 = vmatprep.subr.mxu0 0.0
    %550 = vmatpush1.msra.mxu0 %v215
    %551 = vmatprep.subr.mxu0 0.0
    %552 = vmatpush2.msra.mxu0 0.0
    %553 = vmatprep.subr.mxu0 0.0
    %554 = vmatpush2.msra.mxu0 0.0
    %555 = vmatprep.subr.mxu0 0.0
    %556 = vmatpush2.msra.mxu0 0.0
    %557 = vmatprep.subr.mxu0 0.0
    %558 = vmatpush2.msra.mxu0 0.0
    %559 = vmatprep.subr.mxu0 0.0
    %560 = vmatpush2.msra.mxu0 0.0
    %561 = vmatprep.subr.mxu0 0.0
    %562 = vmatpush2.msra.mxu0 0.0
    %563 = vmatprep.subr.mxu0 0.0
    %564 = vmatpush2.msra.mxu0 0.0
    %565 = vmatprep.subr.mxu0 0.0
    %566 = vmatpush2.msra.mxu0 0.0
    %567 = vmatprep.subr.mxu0 0.0
    %568 = vmatpush2.msra.mxu0 0.0
    %569 = vmatprep.subr.mxu0 0.0
    %570 = vmatpush2.msra.mxu0 0.0
    %571 = vmatprep.subr.mxu0 0.0
    %572 = vmatpush2.msra.mxu0 0.0
    %573 = vmatprep.subr.mxu0 0.0
    %574 = vmatpush2.msra.mxu0 0.0
    %575 = vmatprep.subr.mxu0 0.0
    %576 = vmatpush2.msra.mxu0 0.0
    %577 = vmatprep.subr.mxu0 0.0
    %578 = vmatpush2.msra.mxu0 0.0
    %579 = vmatprep.subr.mxu0 0.0
    %580 = vmatpush2.msra.mxu0 0.0
    %581 = vmatprep.subr.mxu0 0.0
    %582 = vmatpush2.msra.mxu0 0.0
    %583 = vmatprep.mubr.f32.mxu0 0.0
    %584 = vmatmul.mubr.f32.gmra.mxu0 %v518
    %v585 = vpop.f32.mrf.mxu0
    %v586 = vadd.f32 0.0, %v585
    %v587 = vpop.f32.mrf.mxu0
    %588 = vdwg.mxu0
    %v589 = vadd.f32 %v197, %v586
    %v590 = vtanh.pop %v589
    %591 = vmatprep.subr.mxu0 0.0
    %592 = vmatpush1.msra.mxu0 %v230
    %593 = vmatprep.subr.mxu0 0.0
    %594 = vmatpush1.msra.mxu0 %v229
    %595 = vmatprep.subr.mxu0 0.0
    %596 = vmatpush1.msra.mxu0 %v228
    %597 = vmatprep.subr.mxu0 0.0
    %598 = vmatpush1.msra.mxu0 %v227
    %599 = vmatprep.subr.mxu0 0.0
    %600 = vmatpush1.msra.mxu0 %v226
    %601 = vmatprep.subr.mxu0 0.0
    %602 = vmatpush1.msra.mxu0 %v225
    %603 = vmatprep.subr.mxu0 0.0
    %604 = vmatpush1.msra.mxu0 %v224
    %605 = vmatprep.subr.mxu0 0.0
    %606 = vmatpush1.msra.mxu0 %v223
    %607 = vmatprep.subr.mxu0 0.0
    %608 = vmatpush1.msra.mxu0 %v222
    %609 = vmatprep.subr.mxu0 0.0
    %610 = vmatpush1.msra.mxu0 %v221
    %611 = vmatprep.subr.mxu0 0.0
    %612 = vmatpush1.msra.mxu0 %v220
    %613 = vmatprep.subr.mxu0 0.0
    %614 = vmatpush1.msra.mxu0 %v219
    %615 = vmatprep.subr.mxu0 0.0
    %616 = vmatpush1.msra.mxu0 %v218
    %617 = vmatprep.subr.mxu0 0.0
    %618 = vmatpush1.msra.mxu0 %v217
    %619 = vmatprep.subr.mxu0 0.0
    %620 = vmatpush1.msra.mxu0 %v216
    %621 = vmatprep.subr.mxu0 0.0
    %622 = vmatpush1.msra.mxu0 %v215
    %623 = vmatprep.subr.mxu0 0.0
    %624 = vmatpush2.msra.mxu0 0.0
    %625 = vmatprep.subr.mxu0 0.0
    %626 = vmatpush2.msra.mxu0 0.0
    %627 = vmatprep.subr.mxu0 0.0
    %628 = vmatpush2.msra.mxu0 0.0
    %629 = vmatprep.subr.mxu0 0.0
    %630 = vmatpush2.msra.mxu0 0.0
    %631 = vmatprep.subr.mxu0 0.0
    %632 = vmatpush2.msra.mxu0 0.0
    %633 = vmatprep.subr.mxu0 0.0
    %634 = vmatpush2.msra.mxu0 0.0
    %635 = vmatprep.subr.mxu0 0.0
    %636 = vmatpush2.msra.mxu0 0.0
    %637 = vmatprep.subr.mxu0 0.0
    %638 = vmatpush2.msra.mxu0 0.0
    %639 = vmatprep.subr.mxu0 0.0
    %640 = vmatpush2.msra.mxu0 0.0
    %641 = vmatprep.subr.mxu0 0.0
    %642 = vmatpush2.msra.mxu0 0.0
    %643 = vmatprep.subr.mxu0 0.0
    %644 = vmatpush2.msra.mxu0 0.0
    %645 = vmatprep.subr.mxu0 0.0
    %646 = vmatpush2.msra.mxu0 0.0
    %647 = vmatprep.subr.mxu0 0.0
    %648 = vmatpush2.msra.mxu0 0.0
    %649 = vmatprep.subr.mxu0 0.0
    %650 = vmatpush2.msra.mxu0 0.0
    %651 = vmatprep.subr.mxu0 0.0
    %652 = vmatpush2.msra.mxu0 0.0
    %653 = vmatprep.subr.mxu0 0.0
    %654 = vmatpush2.msra.mxu0 0.0
    %655 = vmatprep.mubr.f32.mxu0 0.0
    %656 = vmatmul.mubr.f32.gmra.mxu0 %v590
    %v657 = vpop.f32.mrf.mxu0
    %v658 = vadd.f32 0.0, %v657
    %v659 = vpop.f32.mrf.mxu0
    %660 = vdwg.mxu0
    %v661 = vadd.f32 %v202, %v658
    %v662 = vtanh.pop %v661
    %663 = vmatprep.subr.mxu0 0.0
    %664 = vmatpush1.msra.mxu0 %v230
    %665 = vmatprep.subr.mxu0 0.0
    %666 = vmatpush1.msra.mxu0 %v229
    %667 = vmatprep.subr.mxu0 0.0
    %668 = vmatpush1.msra.mxu0 %v228
    %669 = vmatprep.subr.mxu0 0.0
    %670 = vmatpush1.msra.mxu0 %v227
    %671 = vmatprep.subr.mxu0 0.0
    %672 = vmatpush1.msra.mxu0 %v226
    %673 = vmatprep.subr.mxu0 0.0
    %674 = vmatpush1.msra.mxu0 %v225
    %675 = vmatprep.subr.mxu0 0.0
    %676 = vmatpush1.msra.mxu0 %v224
    %677 = vmatprep.subr.mxu0 0.0
    %678 = vmatpush1.msra.mxu0 %v223
    %679 = vmatprep.subr.mxu0 0.0
    %680 = vmatpush1.msra.mxu0 %v222
    %681 = vmatprep.subr.mxu0 0.0
    %682 = vmatpush1.msra.mxu0 %v221
    %683 = vmatprep.subr.mxu0 0.0
    %684 = vmatpush1.msra.mxu0 %v220
    %685 = vmatprep.subr.mxu0 0.0
    %686 = vmatpush1.msra.mxu0 %v219
    %687 = vmatprep.subr.mxu0 0.0
    %688 = vmatpush1.msra.mxu0 %v218
    %689 = vmatprep.subr.mxu0 0.0
    %690 = vmatpush1.msra.mxu0 %v217
    %691 = vmatprep.subr.mxu0 0.0
    %692 = vmatpush1.msra.mxu0 %v216
    %693 = vmatprep.subr.mxu0 0.0
    %694 = vmatpush1.msra.mxu0 %v215
    %695 = vmatprep.subr.mxu0 0.0
    %696 = vmatpush2.msra.mxu0 0.0
    %697 = vmatprep.subr.mxu0 0.0
    %698 = vmatpush2.msra.mxu0 0.0
    %699 = vmatprep.subr.mxu0 0.0
    %700 = vmatpush2.msra.mxu0 0.0
    %701 = vmatprep.subr.mxu0 0.0
    %702 = vmatpush2.msra.mxu0 0.0
    %703 = vmatprep.subr.mxu0 0.0
    %704 = vmatpush2.msra.mxu0 0.0
    %705 = vmatprep.subr.mxu0 0.0
    %706 = vmatpush2.msra.mxu0 0.0
    %707 = vmatprep.subr.mxu0 0.0
    %708 = vmatpush2.msra.mxu0 0.0
    %709 = vmatprep.subr.mxu0 0.0
    %710 = vmatpush2.msra.mxu0 0.0
    %711 = vmatprep.subr.mxu0 0.0
    %712 = vmatpush2.msra.mxu0 0.0
    %713 = vmatprep.subr.mxu0 0.0
    %714 = vmatpush2.msra.mxu0 0.0
    %715 = vmatprep.subr.mxu0 0.0
    %716 = vmatpush2.msra.mxu0 0.0
    %717 = vmatprep.subr.mxu0 0.0
    %718 = vmatpush2.msra.mxu0 0.0
    %719 = vmatprep.subr.mxu0 0.0
    %720 = vmatpush2.msra.mxu0 0.0
    %721 = vmatprep.subr.mxu0 0.0
    %722 = vmatpush2.msra.mxu0 0.0
    %723 = vmatprep.subr.mxu0 0.0
    %724 = vmatpush2.msra.mxu0 0.0
    %725 = vmatprep.subr.mxu0 0.0
    %726 = vmatpush2.msra.mxu0 0.0
    %727 = vmatprep.mubr.f32.mxu0 0.0
    %728 = vmatmul.mubr.f32.gmra.mxu0 %v662
    %v729 = vpop.f32.mrf.mxu0
    %v730 = vadd.f32 0.0, %v729
    %v731 = vpop.f32.mrf.mxu0
    %732 = vdwg.mxu0
    %v733 = vadd.f32 %v207, %v730
    %v734 = vtanh.pop %v733
    %735 = vmatprep.subr.mxu0 0.0
    %736 = vmatpush1.msra.mxu0 %v230
    %737 = vmatprep.subr.mxu0 0.0
    %738 = vmatpush1.msra.mxu0 %v229
    %739 = vmatprep.subr.mxu0 0.0
    %740 = vmatpush1.msra.mxu0 %v228
    %741 = vmatprep.subr.mxu0 0.0
    %742 = vmatpush1.msra.mxu0 %v227
    %743 = vmatprep.subr.mxu0 0.0
    %744 = vmatpush1.msra.mxu0 %v226
    %745 = vmatprep.subr.mxu0 0.0
    %746 = vmatpush1.msra.mxu0 %v225
    %747 = vmatprep.subr.mxu0 0.0
    %748 = vmatpush1.msra.mxu0 %v224
    %749 = vmatprep.subr.mxu0 0.0
    %750 = vmatpush1.msra.mxu0 %v223
    %751 = vmatprep.subr.mxu0 0.0
    %752 = vmatpush1.msra.mxu0 %v222
    %753 = vmatprep.subr.mxu0 0.0
    %754 = vmatpush1.msra.mxu0 %v221
    %755 = vmatprep.subr.mxu0 0.0
    %756 = vmatpush1.msra.mxu0 %v220
    %757 = vmatprep.subr.mxu0 0.0
    %758 = vmatpush1.msra.mxu0 %v219
    %759 = vmatprep.subr.mxu0 0.0
    %760 = vmatpush1.msra.mxu0 %v218
    %761 = vmatprep.subr.mxu0 0.0
    %762 = vmatpush1.msra.mxu0 %v217
    %763 = vmatprep.subr.mxu0 0.0
    %764 = vmatpush1.msra.mxu0 %v216
    %765 = vmatprep.subr.mxu0 0.0
    %766 = vmatpush1.msra.mxu0 %v215
    %767 = vmatprep.subr.mxu0 0.0
    %768 = vmatpush2.msra.mxu0 0.0
    %769 = vmatprep.subr.mxu0 0.0
    %770 = vmatpush2.msra.mxu0 0.0
    %771 = vmatprep.subr.mxu0 0.0
    %772 = vmatpush2.msra.mxu0 0.0
    %773 = vmatprep.subr.mxu0 0.0
    %774 = vmatpush2.msra.mxu0 0.0
    %775 = vmatprep.subr.mxu0 0.0
    %776 = vmatpush2.msra.mxu0 0.0
    %777 = vmatprep.subr.mxu0 0.0
    %778 = vmatpush2.msra.mxu0 0.0
    %779 = vmatprep.subr.mxu0 0.0
    %780 = vmatpush2.msra.mxu0 0.0
    %781 = vmatprep.subr.mxu0 0.0
    %782 = vmatpush2.msra.mxu0 0.0
    %783 = vmatprep.subr.mxu0 0.0
    %784 = vmatpush2.msra.mxu0 0.0
    %785 = vmatprep.subr.mxu0 0.0
    %786 = vmatpush2.msra.mxu0 0.0
    %787 = vmatprep.subr.mxu0 0.0
    %788 = vmatpush2.msra.mxu0 0.0
    %789 = vmatprep.subr.mxu0 0.0
    %790 = vmatpush2.msra.mxu0 0.0
    %791 = vmatprep.subr.mxu0 0.0
    %792 = vmatpush2.msra.mxu0 0.0
    %793 = vmatprep.subr.mxu0 0.0
    %794 = vmatpush2.msra.mxu0 0.0
    %795 = vmatprep.subr.mxu0 0.0
    %796 = vmatpush2.msra.mxu0 0.0
    %797 = vmatprep.subr.mxu0 0.0
    %798 = vmatpush2.msra.mxu0 0.0
    %799 = vmatprep.mubr.f32.mxu0 0.0
    %800 = vmatmul.mubr.f32.gmra.mxu0 %v734
    %v801 = vpop.f32.mrf.mxu0
    %v802 = vadd.f32 0.0, %v801
    %v803 = vpop.f32.mrf.mxu0
    %804 = vdwg.mxu0
    %v805 = vadd.f32 %v212, %v802
    %v806 = vtanh.pop %v805
    %v807 = vld [vmem:[#allocation8] sm:$0xff]
    %v808 = vld [vmem:[#allocation8 + $0x8] sm:$0xff]
    %v809 = vld [vmem:[#allocation8 + $0x10] sm:$0xff]
    %v810 = vld [vmem:[#allocation8 + $0x18] sm:$0xff]
    %v811 = vld [vmem:[#allocation8 + $0x20] sm:$0xff]
    %v812 = vld [vmem:[#allocation8 + $0x28] sm:$0xff]
    %v813 = vld [vmem:[#allocation8 + $0x30] sm:$0xff]
    %v814 = vld [vmem:[#allocation8 + $0x38] sm:$0xff]
    %v815 = vld [vmem:[#allocation8 + $0x40] sm:$0xff]
    %v816 = vld [vmem:[#allocation8 + $0x48] sm:$0xff]
    %v817 = vld [vmem:[#allocation8 + $0x50] sm:$0xff]
    %v818 = vld [vmem:[#allocation8 + $0x58] sm:$0xff]
    %v819 = vld [vmem:[#allocation8 + $0x60] sm:$0xff]
    %v820 = vld [vmem:[#allocation8 + $0x68] sm:$0xff]
    %v821 = vld [vmem:[#allocation8 + $0x70] sm:$0xff]
    %v822 = vld [vmem:[#allocation8 + $0x78] sm:$0xff]
    %v823 = vld [vmem:[%s5] sm:$0x1]
    %v825 = vlaneseq
    %v826 = vshrl.u32 %v825, 7
    %v827 = vsub.s32 0, %v826
    %v828 = vrot.slane %v823, %v827
    %830 = vmatprep.subr.mxu0 0.0
    %831 = vmatpush1.msra.mxu0 %v822
    %832 = vmatprep.subr.mxu0 0.0
    %833 = vmatpush1.msra.mxu0 %v821
    %834 = vmatprep.subr.mxu0 0.0
    %835 = vmatpush1.msra.mxu0 %v820
    %836 = vmatprep.subr.mxu0 0.0
    %837 = vmatpush1.msra.mxu0 %v819
    %838 = vmatprep.subr.mxu0 0.0
    %839 = vmatpush1.msra.mxu0 %v818
    %840 = vmatprep.subr.mxu0 0.0
    %841 = vmatpush1.msra.mxu0 %v817
    %842 = vmatprep.subr.mxu0 0.0
    %843 = vmatpush1.msra.mxu0 %v816
    %844 = vmatprep.subr.mxu0 0.0
    %845 = vmatpush1.msra.mxu0 %v815
    %846 = vmatprep.subr.mxu0 0.0
    %847 = vmatpush1.msra.mxu0 %v814
    %848 = vmatprep.subr.mxu0 0.0
    %849 = vmatpush1.msra.mxu0 %v813
    %850 = vmatprep.subr.mxu0 0.0
    %851 = vmatpush1.msra.mxu0 %v812
    %852 = vmatprep.subr.mxu0 0.0
    %853 = vmatpush1.msra.mxu0 %v811
    %854 = vmatprep.subr.mxu0 0.0
    %855 = vmatpush1.msra.mxu0 %v810
    %856 = vmatprep.subr.mxu0 0.0
    %857 = vmatpush1.msra.mxu0 %v809
    %858 = vmatprep.subr.mxu0 0.0
    %859 = vmatpush1.msra.mxu0 %v808
    %860 = vmatprep.subr.mxu0 0.0
    %861 = vmatpush1.msra.mxu0 %v807
    %862 = vmatprep.subr.mxu0 0.0
    %863 = vmatpush2.msra.mxu0 0.0
    %864 = vmatprep.subr.mxu0 0.0
    %865 = vmatpush2.msra.mxu0 0.0
    %866 = vmatprep.subr.mxu0 0.0
    %867 = vmatpush2.msra.mxu0 0.0
    %868 = vmatprep.subr.mxu0 0.0
    %869 = vmatpush2.msra.mxu0 0.0
    %870 = vmatprep.subr.mxu0 0.0
    %871 = vmatpush2.msra.mxu0 0.0
    %872 = vmatprep.subr.mxu0 0.0
    %873 = vmatpush2.msra.mxu0 0.0
    %874 = vmatprep.subr.mxu0 0.0
    %875 = vmatpush2.msra.mxu0 0.0
    %876 = vmatprep.subr.mxu0 0.0
    %877 = vmatpush2.msra.mxu0 0.0
    %878 = vmatprep.subr.mxu0 0.0
    %879 = vmatpush2.msra.mxu0 0.0
    %880 = vmatprep.subr.mxu0 0.0
    %881 = vmatpush2.msra.mxu0 0.0
    %882 = vmatprep.subr.mxu0 0.0
    %883 = vmatpush2.msra.mxu0 0.0
    %884 = vmatprep.subr.mxu0 0.0
    %885 = vmatpush2.msra.mxu0 0.0
    %886 = vmatprep.subr.mxu0 0.0
    %887 = vmatpush2.msra.mxu0 0.0
    %888 = vmatprep.subr.mxu0 0.0
    %889 = vmatpush2.msra.mxu0 0.0
    %890 = vmatprep.subr.mxu0 0.0
    %891 = vmatpush2.msra.mxu0 0.0
    %892 = vmatprep.subr.mxu0 0.0
    %893 = vmatpush2.msra.mxu0 0.0
    %894 = vmatprep.mubr.f32.mxu0 0.0
    %895 = vmatmul.mubr.f32.gmra.mxu0 %v806
    %v896 = vpop.f32.mrf.mxu0
    %v897 = vadd.f32 %v828, %v896
    %v898 = vpop.f32.mrf.mxu0
    %899 = vdwg.mxu0
    %900 = vst [vmem:[#allocation10] sm:$0xff] %v897
    // Predicated region
    $region42: #{tpu_custom_call.1} parent=1 // pred_check
      _
    $region43: #{tpu_custom_call.1} parent=1 // pred_check_branch
      %902 = sbr.rel (0) target = $region45
    $region44: #{tpu_custom_call.1} parent=1 // pred_region
      %s904 = ssub.s32 128, 128
      %905 = vsyncadd [#allocation4], %s904
      %s907 = sshll.u32 [#allocation10], 4
      %s908 = int_to_ptr.vmem [resolvable:$true] %s907
      %910 = dma.vmem_to_hbm [thread:$0]  %s908, 128, %s6, [#allocation4]
    $region45: #{tpu_custom_call.1} parent=1 // pred_fallthru
      _
    // Predicated region
    $region46: #{tpu_custom_call.1} parent=1 // pred_check
      _
    $region47: #{tpu_custom_call.1} parent=1 // pred_check_branch
      %912 = sbr.rel (0) target = $region49
    $region48: #{tpu_custom_call.1} parent=1 // pred_region
      %913 = dma.done [#allocation4], 128
    $region49: #{tpu_custom_call.1} parent=1 // pred_fallthru
      _
    %914 = vsyncpa [#allocation3], 1
    %915 = vsyncpa [#allocation6], 1
    %916 = vsyncpa [#allocation9], 1
    %917 = vsyncpa [#allocation4], 1

</llo_original>
